<compile_context>
chip_gen: v7x
topology: tpu7x:2x2x1
jax: 0.10.0
libtpu: 0.0.40
codegen_flags: <defaults>
</compile_context>

<pallas_src>
import functools
import math

import jax
import jax.numpy as jnp
from jax.experimental import pallas as pl
from jax.experimental.pallas import tpu as pltpu


def _round_up(x, m):
    return ((x + m - 1) // m) * m


# ---------------------------------------------------------------------------
# Pass 1: streamed unnormalized logits + online logsumexp
# ---------------------------------------------------------------------------
def _logits_lse_kernel(x_ref, w_ref, b_ref, logits_ref, lse_ref, m_ref, l_ref):
    # x_ref:      (TM, D)  compute dtype
    # w_ref:      (D, TV)  compute dtype   (pre-transposed nn.Linear weight)
    # b_ref:      (1, TV)  f32             (-1e30 on padded vocab columns)
    # logits_ref: (TM, TV) out dtype       streamed, UNNORMALIZED logits
    # lse_ref:    (TM, 1)  f32             per-row logsumexp (last vocab tile)
    # m_ref/l_ref:(TM, 1)  f32             online-softmax running max / sum
    vj = pl.program_id(1)

    @pl.when(vj == 0)
    def _init():
        m_ref[...] = jnp.full_like(m_ref, -jnp.inf)
        l_ref[...] = jnp.zeros_like(l_ref)

    # (TM, D) @ (D, TV) -> (TM, TV), f32 accumulation on the MXU.
    logits = jnp.dot(x_ref[...], w_ref[...], preferred_element_type=jnp.float32)
    logits = logits + b_ref[...]                       # broadcast (1, TV)

    # Online logsumexp update (all f32).
    m_prev = m_ref[...]
    m_new = jnp.maximum(m_prev, jnp.max(logits, axis=-1, keepdims=True))
    alpha = jnp.exp(m_prev - m_new)
    l_ref[...] = alpha * l_ref[...] + jnp.sum(jnp.exp(logits - m_new),
                                              axis=-1, keepdims=True)
    m_ref[...] = m_new

    # Single aligned, lane-dense store of the raw logits tile.
    logits_ref[...] = logits.astype(logits_ref.dtype)

    @pl.when(vj == pl.num_programs(1) - 1)
    def _finalize():
        lse_ref[...] = m_ref[...] + jnp.log(l_ref[...])


# ---------------------------------------------------------------------------
# Pass 2: normalize logits in place (log_softmax = logits - lse)
# ---------------------------------------------------------------------------
def _normalize_kernel(logits_ref, lse_ref, o_ref):
    o_ref[...] = (logits_ref[...].astype(jnp.float32)
                  - lse_ref[...]).astype(o_ref.dtype)


def _vmem_budget_bytes():
    try:
        cap = int(pltpu.get_tpu_info().vmem_capacity_bytes)
    except Exception:
        cap = 64 * 1024 * 1024          # conservative (v7x-sized) fallback
    return (cap * 3) // 4               # single ~75% headroom factor


def prepare_generator_params(weight, bias, vocab_p, compute_dtype):
    """Cast / transpose / pad the projection parameters.

    This is a full V*D HBM read+write; in a stateful module it should be done
    ONCE and cached across forward calls rather than per call.
    """
    vocab, _ = weight.shape
    wt = weight.astype(compute_dtype).T                  # (d_model, vocab): vocab on lanes
    bc = bias.astype(jnp.float32).reshape(1, vocab)
    if vocab_p != vocab:
        wt = jnp.pad(wt, ((0, 0), (0, vocab_p - vocab)))
        # -1e30 bias on padded columns => exp underflows to 0 in the LSE.
        bc = jnp.pad(bc, ((0, 0), (0, vocab_p - vocab)), constant_values=-1e30)
    return wt, bc


def generator_forward(x, weight, bias, *, tm=256, tv=512,
                      compute_dtype=jnp.bfloat16, out_dtype=jnp.bfloat16,
                      weight_buffers=2, vmem_limit_bytes=None):
    """x: (..., d_model); weight: (vocab, d_model) [nn.Linear layout]; bias: (vocab,)."""
    # TODO(synk): optional fp8 (e4m3) weight path with per-tile scales for v7x.
    orig_shape = x.shape
    d_model = orig_shape[-1]
    vocab, d_model_w = weight.shape
    assert d_model_w == d_model
    rows = int(math.prod(orig_shape[:-1]))

    cd = jnp.dtype(compute_dtype).itemsize
    od = jnp.dtype(out_dtype).itemsize

    budget = int(vmem_limit_bytes) if vmem_limit_bytes else _vmem_budget_bytes()

    # --- tile selection ------------------------------------------------------
    ra = 8 if cd >= 4 else (16 if cd == 2 else 32)       # sublane packing of compute dtype
    tm = _round_up(max(ra, min(int(tm), _round_up(rows, ra))), ra)
    half = _round_up((rows + 1) // 2, ra)
    if half >= 128 and tm > half:
        tm = half                                        # v7x: keep >=2 row tiles when affordable
    tv = _round_up(max(128, min(int(tv), _round_up(vocab, 128))), 128)

    def est(tm_, tv_):
        return (2 * tm_ * d_model * cd        # x block (double-buffered)
                + 2 * d_model * tv_ * cd      # weight block (double-buffered)
                + 2 * tv_ * 4                 # bias block
                + 2 * tm_ * tv_ * od          # streamed logits output block
                + 2 * tm_ * 4                 # lse output block
                + 4 * tm_ * 4                 # m / l scratch
                + 4 * tm_ * tv_ * 4)          # f32 logits / exp temporaries

    # Shrink tv first (keeps tm large => fewer weight HBM re-reads); never
    # shrink either below 128 (MXU row/lane occupancy).
    while est(tm, tv) > budget and (tv > 128 or tm > 128):
        if tv > 128:
            tv = max(128, _round_up(tv // 2, 128))
        else:
            tm = max(128, _round_up(tm // 2, ra))

    rows_p = _round_up(rows, tm)
    vocab_p = _round_up(vocab, tv)
    n_vt = vocab_p // tv

    # --- prepare operands ----------------------------------------------------
    xc = x.reshape(rows, d_model).astype(compute_dtype)
    if rows_p != rows:
        xc = jnp.pad(xc, ((0, rows_p - rows), (0, 0)))
    # NOTE: cache this across calls in a stateful wrapper (V*D HBM traffic).
    wt, bc = prepare_generator_params(weight, bias, vocab_p, compute_dtype)

    w_spec = pl.BlockSpec((d_model, tv), lambda i, j: (0, j))
    if weight_buffers > 2:                               # hide weight DMA if exposed
        w_spec = pl.BlockSpec((d_model, tv), lambda i, j: (0, j),
                              pipeline_mode=pl.Buffered(weight_buffers))

    # --- pass 1: logits + LSE -------------------------------------------------
    logits, lse = pl.pallas_call(
        _logits_lse_kernel,
        out_shape=(jax.ShapeDtypeStruct((rows_p, vocab_p), out_dtype),
                   jax.ShapeDtypeStruct((rows_p, 1), jnp.float32)),
        grid_spec=pltpu.PrefetchScalarGridSpec(
            num_scalar_prefetch=0,
            grid=(rows_p // tm, n_vt),
            in_specs=[
                pl.BlockSpec((tm, d_model), lambda i, j: (i, 0)),   # x rows
                w_spec,                                             # weight tile
                pl.BlockSpec((1, tv), lambda i, j: (0, j)),         # bias tile
            ],
            out_specs=[
                pl.BlockSpec((tm, tv), lambda i, j: (i, j)),        # streamed logits
                pl.BlockSpec((tm, 1), lambda i, j: (i, 0)),         # per-row LSE
            ],
            scratch_shapes=[pltpu.VMEM((tm, 1), jnp.float32),       # running max
                            pltpu.VMEM((tm, 1), jnp.float32)],      # running sum
        ),
        compiler_params=pltpu.CompilerParams(
            dimension_semantics=("parallel", "arbitrary"),
            vmem_limit_bytes=int(budget),
        ),
    )(xc, wt, bc)

    # --- pass 2: in-place normalization (lane-dense, widened tiles) ----------
    def est_norm(tv_):
        return tm * tv_ * (4 * od + 8)        # 2x in + 2x out buffers + f32 temps

    tvn = tv
    while vocab_p % (2 * tvn) == 0 and 2 * tvn <= 2048 and est_norm(2 * tvn) <= budget:
        tvn *= 2

    out = pl.pallas_call(
        _normalize_kernel,
        out_shape=jax.ShapeDtypeStruct((rows_p, vocab_p), out_dtype),
        grid_spec=pltpu.PrefetchScalarGridSpec(
            num_scalar_prefetch=0,
            grid=(rows_p // tm, vocab_p // tvn),
            in_specs=[
                pl.BlockSpec((tm, tvn), lambda i, j: (i, j)),
                pl.BlockSpec((tm, 1), lambda i, j: (i, 0)),
            ],
            out_specs=pl.BlockSpec((tm, tvn), lambda i, j: (i, j)),
        ),
        input_output_aliases={0: 0},          # normalize the logits buffer in place
        compiler_params=pltpu.CompilerParams(
            dimension_semantics=("parallel", "parallel"),
            vmem_limit_bytes=int(budget),
        ),
    )(logits, lse)

    if rows_p != rows or vocab_p != vocab:
        out = out[:rows, :vocab]
    return out.reshape(*orig_shape[:-1], vocab)


if __name__ == "__main__":
    key = jax.random.PRNGKey(0)
    kx, kw, kb, kx2 = jax.random.split(key, 4)

    # ---- Test A: single tile, f32 matmul + f32 output (tight check) ---------
    batch, seq, d_model, vocab = 2, 8, 32, 128
    bound = 1.0 / math.sqrt(d_model)
    weight = jax.random.uniform(kw, (vocab, d_model), jnp.float32, -bound, bound)
    bias = jax.random.uniform(kb, (vocab,), jnp.float32, -bound, bound)
    x = jax.random.normal(kx, (batch, seq, d_model), jnp.float32)

    out = generator_forward(x, weight, bias,
                            compute_dtype=jnp.float32, out_dtype=jnp.float32)
    out = jax.block_until_ready(out)
    ref = jax.nn.log_softmax(x @ weight.T + bias, axis=-1)
    assert out.shape == (batch, seq, vocab)
    assert jnp.allclose(out, ref, atol=1e-3, rtol=1e-3), "mismatch (f32 path)"

    # ---- Test B: row+vocab padding, 2 vocab tiles, bf16 compute & output ----
    batch2, seq2, vocab2 = 2, 6, 200        # rows=12 -> padded; vocab=200 -> padded
    w2 = jax.random.uniform(kw, (vocab2, d_model), jnp.float32, -bound, bound)
    b2 = jax.random.uniform(kb, (vocab2,), jnp.float32, -bound, bound)
    x2 = jax.random.normal(kx2, (batch2, seq2, d_model), jnp.float32)

    out2 = generator_forward(x2, w2, b2, tv=128)   # 2 vocab tiles, bf16 defaults
    out2 = jax.block_until_ready(out2)
    ref2 = jax.nn.log_softmax(x2 @ w2.T + b2, axis=-1)
    assert out2.shape == (batch2, seq2, vocab2)
    assert out2.dtype == jnp.bfloat16
    assert jnp.allclose(out2.astype(jnp.float32), ref2, atol=1e-1, rtol=2e-2), \
        "mismatch (bf16 tiled path)"

    print("KERNEL_OK")
</pallas_src>

<mosaic_0001>
module attributes {stable_mosaic.version = 11 : i64} {
  func.func @_logits_lse_kernel(%arg0: i32, %arg1: i32, %arg2: memref<16x32xf32, #tpu.memory_space<vmem>>, %arg3: memref<32x128xf32, #tpu.memory_space<vmem>>, %arg4: memref<1x128xf32, #tpu.memory_space<vmem>>, %arg5: memref<16x128xf32, #tpu.memory_space<vmem>>, %arg6: memref<16x1xf32, #tpu.memory_space<vmem>>, %arg7: memref<16x1xf32, #tpu.memory_space<vmem>>, %arg8: memref<16x1xf32, #tpu.memory_space<vmem>>) attributes {dimension_semantics = [#tpu.dimension_semantics<parallel>, #tpu.dimension_semantics<arbitrary>], iteration_bounds = array<i64: 1, 1>, scalar_prefetch = 0 : i64, scratch_operands = 2 : i64, tpu.core_type = #tpu.core_type<tc>, window_params = [{transform_indices = @transform_0, window_bounds = array<i64: 16, 32>}, {transform_indices = @transform_1, window_bounds = array<i64: 32, 128>}, {transform_indices = @transform_2, window_bounds = array<i64: 1, 128>}, {transform_indices = @transform_3, window_bounds = array<i64: 16, 128>}, {transform_indices = @transform_4, window_bounds = array<i64: 16, 1>}]} {
    %c0_i32 = arith.constant 0 : i32
    %0 = arith.cmpi eq, %arg1, %c0_i32 : i32
    %1 = arith.extui %0 : i1 to i32
    %c0_i32_0 = arith.constant 0 : i32
    %2 = arith.cmpi ne, %1, %c0_i32_0 : i32
    scf.if %2 {
      %cst_20 = arith.constant 0xFF800000 : f32
      %29 = vector.broadcast %cst_20 : f32 to vector<16x1xf32>
      %c0_21 = arith.constant 0 : index
      %c0_22 = arith.constant 0 : index
      %30 = vector.load %arg7[%c0_21, %c0_22] : memref<16x1xf32, #tpu.memory_space<vmem>>, vector<16x1xf32>
      tpu.vector_store %arg7[%c0_21, %c0_22], %29 {strides = array<i32>} : memref<16x1xf32, #tpu.memory_space<vmem>>, vector<16x1xf32>,
      %cst_23 = arith.constant 0.000000e+00 : f32
      %31 = vector.broadcast %cst_23 : f32 to vector<16x1xf32>
      %c0_24 = arith.constant 0 : index
      %c0_25 = arith.constant 0 : index
      %32 = vector.load %arg8[%c0_24, %c0_25] : memref<16x1xf32, #tpu.memory_space<vmem>>, vector<16x1xf32>
      tpu.vector_store %arg8[%c0_24, %c0_25], %31 {strides = array<i32>} : memref<16x1xf32, #tpu.memory_space<vmem>>, vector<16x1xf32>,
    } else {
    }
    %c0 = arith.constant 0 : index
    %c0_1 = arith.constant 0 : index
    %3 = vector.load %arg2[%c0, %c0_1] : memref<16x32xf32, #tpu.memory_space<vmem>>, vector<16x32xf32>
    %c0_2 = arith.constant 0 : index
    %c0_3 = arith.constant 0 : index
    %4 = vector.load %arg3[%c0_2, %c0_3] : memref<32x128xf32, #tpu.memory_space<vmem>>, vector<32x128xf32>
    %cst = arith.constant dense<0.000000e+00> : vector<16x128xf32>
    %5 = tpu.matmul %3, %4, %cst {dimension_numbers = #tpu.dot_dimension_numbers<[1], [0], [0], [1], [0, 0, 1, 1], [], []>} : vector<16x32xf32>, vector<32x128xf32>, vector<16x128xf32> -> vector<16x128xf32>
    %c0_4 = arith.constant 0 : index
    %c0_5 = arith.constant 0 : index
    %6 = vector.load %arg4[%c0_4, %c0_5] : memref<1x128xf32, #tpu.memory_space<vmem>>, vector<1x128xf32>
    %7 = vector.broadcast %6 : vector<1x128xf32> to vector<16x128xf32>
    %8 = arith.addf %5, %7 : vector<16x128xf32>
    %c0_6 = arith.constant 0 : index
    %c0_7 = arith.constant 0 : index
    %9 = vector.load %arg7[%c0_6, %c0_7] : memref<16x1xf32, #tpu.memory_space<vmem>>, vector<16x1xf32>
    %cst_8 = arith.constant dense<0xFF800000> : vector<16xf32>
    %10 = vector.multi_reduction <maximumf>, %8, %cst_8 [1] : vector<16x128xf32> to vector<16xf32>
    %11 = vector.shape_cast %10 : vector<16xf32> to vector<16x1xf32>
    %12 = arith.maximumf %9, %11 : vector<16x1xf32>
    %13 = arith.subf %9, %12 : vector<16x1xf32>
    %14 = math.exp %13 : vector<16x1xf32>
    %c0_9 = arith.constant 0 : index
    %c0_10 = arith.constant 0 : index
    %15 = vector.load %arg8[%c0_9, %c0_10] : memref<16x1xf32, #tpu.memory_space<vmem>>, vector<16x1xf32>
    %16 = arith.mulf %14, %15 : vector<16x1xf32>
    %17 = vector.broadcast %12 : vector<16x1xf32> to vector<16x128xf32>
    %18 = arith.subf %8, %17 : vector<16x128xf32>
    %19 = math.exp %18 : vector<16x128xf32>
    %cst_11 = arith.constant dense<0.000000e+00> : vector<16xf32>
    %20 = vector.multi_reduction <add>, %19, %cst_11 [1] : vector<16x128xf32> to vector<16xf32>
    %21 = vector.shape_cast %20 : vector<16xf32> to vector<16x1xf32>
    %22 = arith.addf %16, %21 : vector<16x1xf32>
    %c0_12 = arith.constant 0 : index
    %c0_13 = arith.constant 0 : index
    %23 = vector.load %arg8[%c0_12, %c0_13] : memref<16x1xf32, #tpu.memory_space<vmem>>, vector<16x1xf32>
    tpu.vector_store %arg8[%c0_12, %c0_13], %22 {strides = array<i32>} : memref<16x1xf32, #tpu.memory_space<vmem>>, vector<16x1xf32>,
    %c0_14 = arith.constant 0 : index
    %c0_15 = arith.constant 0 : index
    %24 = vector.load %arg7[%c0_14, %c0_15] : memref<16x1xf32, #tpu.memory_space<vmem>>, vector<16x1xf32>
    tpu.vector_store %arg7[%c0_14, %c0_15], %12 {strides = array<i32>} : memref<16x1xf32, #tpu.memory_space<vmem>>, vector<16x1xf32>,
    %c0_16 = arith.constant 0 : index
    %c0_17 = arith.constant 0 : index
    %25 = vector.load %arg5[%c0_16, %c0_17] : memref<16x128xf32, #tpu.memory_space<vmem>>, vector<16x128xf32>
    tpu.vector_store %arg5[%c0_16, %c0_17], %8 {strides = array<i32>} : memref<16x128xf32, #tpu.memory_space<vmem>>, vector<16x128xf32>,
    %c0_i32_18 = arith.constant 0 : i32
    %26 = arith.cmpi eq, %arg1, %c0_i32_18 : i32
    %27 = arith.extui %26 : i1 to i32
    %c0_i32_19 = arith.constant 0 : i32
    %28 = arith.cmpi ne, %27, %c0_i32_19 : i32
    scf.if %28 {
      %c0_20 = arith.constant 0 : index
      %c0_21 = arith.constant 0 : index
      %29 = vector.load %arg7[%c0_20, %c0_21] : memref<16x1xf32, #tpu.memory_space<vmem>>, vector<16x1xf32>
      %c0_22 = arith.constant 0 : index
      %c0_23 = arith.constant 0 : index
      %30 = vector.load %arg8[%c0_22, %c0_23] : memref<16x1xf32, #tpu.memory_space<vmem>>, vector<16x1xf32>
      %31 = math.log %30 : vector<16x1xf32>
      %32 = arith.addf %29, %31 : vector<16x1xf32>
      %c0_24 = arith.constant 0 : index
      %c0_25 = arith.constant 0 : index
      %33 = vector.load %arg6[%c0_24, %c0_25] : memref<16x1xf32, #tpu.memory_space<vmem>>, vector<16x1xf32>
      tpu.vector_store %arg6[%c0_24, %c0_25], %32 {strides = array<i32>} : memref<16x1xf32, #tpu.memory_space<vmem>>, vector<16x1xf32>,
    } else {
    }
    return
  }
  func.func @transform_0(%arg0: i32, %arg1: i32) -> (i32, i32) {
    %c0_i32 = arith.constant 0 : i32
    %c0_i32_0 = arith.constant 0 : i32
    return %arg0, %c0_i32 : i32, i32
  }
  func.func @transform_1(%arg0: i32, %arg1: i32) -> (i32, i32) {
    %c0_i32 = arith.constant 0 : i32
    %c0_i32_0 = arith.constant 0 : i32
    return %c0_i32, %arg1 : i32, i32
  }
  func.func @transform_2(%arg0: i32, %arg1: i32) -> (i32, i32) {
    %c0_i32 = arith.constant 0 : i32
    %c0_i32_0 = arith.constant 0 : i32
    return %c0_i32, %arg1 : i32, i32
  }
  func.func @transform_3(%arg0: i32, %arg1: i32) -> (i32, i32) {
    %c0_i32 = arith.constant 0 : i32
    return %arg0, %arg1 : i32, i32
  }
  func.func @transform_4(%arg0: i32, %arg1: i32) -> (i32, i32) {
    %c0_i32 = arith.constant 0 : i32
    %c0_i32_0 = arith.constant 0 : i32
    return %arg0, %c0_i32 : i32, i32
  }
}

</mosaic_0001>

<llo_original>
// kernel: tpu_custom_call.1
$region0: #{tpu_custom_call.1}
  #allocation0 [shape = 'u32[]', space=smem, size = 0x4, offset = 0x4, fixed_abs, tag = 'smem constant byte address 0x4 - core index']
  #allocation1 [shape = 'u32[144,128]{1,0:T(1,128)}', space=vmem, size = 0x12000, scoped, tag = 'internal scratch']
  #allocation2 [shape = 'f32[16,1]{1,0:T(8,128)}', space=vmem, size = 0x2000, scoped, tag = 'scratch operand']
  #allocation3 [shape = 'f32[16,1]{1,0:T(8,128)}', space=vmem, size = 0x2000, scoped, tag = 'scratch operand']
  %s0 = inlined_call_operand.hbm [shape: f32[16,32], index: 0, kind: input, shape index: {}]
  %s1 = inlined_call_operand.hbm [shape: f32[32,128], index: 1, kind: input, shape index: {}]
  %s2 = inlined_call_operand.vmem [shape: f32[1,128], index: 2, kind: input, shape index: {}]
  %s3 = inlined_call_operand.hbm [shape: f32[16,128], index: 3, kind: output, shape index: {0}]
  %s4 = inlined_call_operand.vmem [shape: f32[16,1], index: 4, kind: output, shape index: {1}]
  %5 = xla_tuple %s3, %s4
  %s6 = sld [smem:[#allocation0]]
  $region46: #{tpu_custom_call.1} parent=0
    _
  %s8 = ssub.s32 1, %s6
  %s9 = scalar_select 0, %s8, %s6
  $region1: #{tpu_custom_call.1} parent=0
    #allocation4 [shape = 'u8[8192]{0}', space=vmem, size = 0x2000, scoped, tag = 'input window, operand 0, single buffered']
    #allocation5 [shape = 's32[1]{0}', space=sflag, size = 0x4, scoped, tag = 'scoped memory for tpu_custom_call.1']
    #allocation6 [shape = 's32[1]{0}', space=sflag, size = 0x4, scoped, tag = 'scoped memory for tpu_custom_call.1']
    #allocation7 [shape = 'u8[16384]{0}', space=vmem, size = 0x4000, scoped, tag = 'input window, operand 1, single buffered']
    #allocation8 [shape = 's32[1]{0}', space=sflag, size = 0x4, scoped, tag = 'scoped memory for tpu_custom_call.1']
    #allocation9 [shape = 'u8[8192]{0}', space=vmem, size = 0x2000, scoped, tag = 'output window, operand 0, single buffered']
    %10 = vsyncpa [#allocation5], 0
    %11 = vsyncpa [#allocation8], 0
    %12 = vsyncpa [#allocation6], 0
    // Predicated region
    $region2: #{tpu_custom_call.1} parent=1 // pred_check
      _
    $region3: #{tpu_custom_call.1} parent=1 // pred_check_branch
      %14 = sbr.rel (0) target = $region5
    $region4: #{tpu_custom_call.1} parent=1 // pred_region
      %s16 = ssub.s32 256, 256
      %17 = vsyncadd [#allocation5], %s16
      %s18 = sshll.u32 [#allocation4], 4
      %s19 = int_to_ptr.vmem [resolvable:$true] %s18
      %24 = dma.hbm_to_vmem [thread:$0]  %s0, 256, %s19, [#allocation5], 128, 128, 8
    $region5: #{tpu_custom_call.1} parent=1 // pred_fallthru
      _
    // Predicated region
    $region6: #{tpu_custom_call.1} parent=1 // pred_check
      _
    $region7: #{tpu_custom_call.1} parent=1 // pred_check_branch
      %26 = sbr.rel (0) target = $region9
    $region8: #{tpu_custom_call.1} parent=1 // pred_region
      %s28 = ssub.s32 512, 512
      %29 = vsyncadd [#allocation8], %s28
      %s30 = sshll.u32 [#allocation7], 4
      %s31 = int_to_ptr.vmem [resolvable:$true] %s30
      %36 = dma.hbm_to_vmem [thread:$0]  %s1, 512, %s31, [#allocation8], 128, 128, 8
    $region9: #{tpu_custom_call.1} parent=1 // pred_fallthru
      _
    // Predicated region
    $region10: #{tpu_custom_call.1} parent=1 // pred_check
      _
    $region11: #{tpu_custom_call.1} parent=1 // pred_check_branch
      %38 = sbr.rel (0) target = $region13
    $region12: #{tpu_custom_call.1} parent=1 // pred_region
      _
    $region13: #{tpu_custom_call.1} parent=1 // pred_fallthru
      _
    // Predicated region
    $region14: #{tpu_custom_call.1} parent=1 // pred_check
      _
    $region15: #{tpu_custom_call.1} parent=1 // pred_check_branch
      %40 = sbr.rel (0) target = $region17
    $region16: #{tpu_custom_call.1} parent=1 // pred_region
      %41 = dma.done [#allocation5], 256
    $region17: #{tpu_custom_call.1} parent=1 // pred_fallthru
      _
    // Predicated region
    $region18: #{tpu_custom_call.1} parent=1 // pred_check
      _
    $region19: #{tpu_custom_call.1} parent=1 // pred_check_branch
      %43 = sbr.rel (0) target = $region21
    $region20: #{tpu_custom_call.1} parent=1 // pred_region
      %44 = dma.done [#allocation8], 512
    $region21: #{tpu_custom_call.1} parent=1 // pred_fallthru
      _
    %p45 = scmp.eq.s32.totalorder 0, 0
    // Predicated region
    $region22: #{tpu_custom_call.1} parent=1 // pred_check
      %p46 = pneg %p45
    $region23: #{tpu_custom_call.1} parent=1 // pred_check_branch
      %48 = sbr.rel (%p46) target = $region25
    $region24: #{tpu_custom_call.1} parent=1 // pred_region
      %vm49 = vcmask 7168
      %50 = vst.msk [vmem:[#allocation2] sm:$0xff] %vm49, -inf
      %51 = vst.msk [vmem:[#allocation2 + $0x8] sm:$0xff] %vm49, -inf
      %52 = vst.msk [vmem:[#allocation3] sm:$0xff] %vm49, 0.0
      %53 = vst.msk [vmem:[#allocation3 + $0x8] sm:$0xff] %vm49, 0.0
    $region25: #{tpu_custom_call.1} parent=1 // pred_fallthru
      _
    %v54 = vld [vmem:[#allocation4] sm:$0xff]
    %v55 = vld [vmem:[#allocation4 + $0x8] sm:$0xff]
    %v56 = vld [vmem:[#allocation7] sm:$0xff]
    %v57 = vld [vmem:[#allocation7 + $0x8] sm:$0xff]
    %v58 = vld [vmem:[#allocation7 + $0x10] sm:$0xff]
    %v59 = vld [vmem:[#allocation7 + $0x18] sm:$0xff]
    %v60 = vld [vmem:[%s2] sm:$0x1]
    %v62 = vlaneseq
    %v63 = vshrl.u32 %v62, 7
    %v64 = vsub.s32 0, %v63
    %v65 = vrot.slane %v60, %v64
    %vm67 = vcmask 261120
    %v69 = vsel %vm67, %v54, 0
    %v72 = vsel %vm67, %v55, 0
    %74 = vmatprep.subr.mxu0 0.0
    %75 = vmatpush1.msra.mxu0 %v56
    %76 = vmatprep.subr.mxu0 0.0
    %77 = vmatpush1.msra.mxu0 %v57
    %78 = vmatprep.subr.mxu0 0.0
    %79 = vmatpush1.msra.mxu0 %v58
    %80 = vmatprep.subr.mxu0 0.0
    %81 = vmatpush1.msra.mxu0 %v59
    %82 = vmatprep.subr.mxu0 0.0
    %83 = vmatpush1.msra.mxu0 0.0
    %84 = vmatprep.subr.mxu0 0.0
    %85 = vmatpush1.msra.mxu0 0.0
    %86 = vmatprep.subr.mxu0 0.0
    %87 = vmatpush1.msra.mxu0 0.0
    %88 = vmatprep.subr.mxu0 0.0
    %89 = vmatpush1.msra.mxu0 0.0
    %90 = vmatprep.subr.mxu0 0.0
    %91 = vmatpush1.msra.mxu0 0.0
    %92 = vmatprep.subr.mxu0 0.0
    %93 = vmatpush1.msra.mxu0 0.0
    %94 = vmatprep.subr.mxu0 0.0
    %95 = vmatpush1.msra.mxu0 0.0
    %96 = vmatprep.subr.mxu0 0.0
    %97 = vmatpush1.msra.mxu0 0.0
    %98 = vmatprep.subr.mxu0 0.0
    %99 = vmatpush1.msra.mxu0 0.0
    %100 = vmatprep.subr.mxu0 0.0
    %101 = vmatpush1.msra.mxu0 0.0
    %102 = vmatprep.subr.mxu0 0.0
    %103 = vmatpush1.msra.mxu0 0.0
    %104 = vmatprep.subr.mxu0 0.0
    %105 = vmatpush1.msra.mxu0 0.0
    %106 = vmatprep.subr.mxu0 0.0
    %107 = vmatpush1.msra.mxu0 0.0
    %108 = vmatprep.subr.mxu0 0.0
    %109 = vmatpush1.msra.mxu0 0.0
    %110 = vmatprep.subr.mxu0 0.0
    %111 = vmatpush1.msra.mxu0 0.0
    %112 = vmatprep.subr.mxu0 0.0
    %113 = vmatpush1.msra.mxu0 0.0
    %114 = vmatprep.subr.mxu0 0.0
    %115 = vmatpush1.msra.mxu0 0.0
    %116 = vmatprep.subr.mxu0 0.0
    %117 = vmatpush1.msra.mxu0 0.0
    %118 = vmatprep.subr.mxu0 0.0
    %119 = vmatpush1.msra.mxu0 0.0
    %120 = vmatprep.subr.mxu0 0.0
    %121 = vmatpush1.msra.mxu0 0.0
    %122 = vmatprep.subr.mxu0 0.0
    %123 = vmatpush1.msra.mxu0 0.0
    %124 = vmatprep.subr.mxu0 0.0
    %125 = vmatpush1.msra.mxu0 0.0
    %126 = vmatprep.subr.mxu0 0.0
    %127 = vmatpush1.msra.mxu0 0.0
    %128 = vmatprep.subr.mxu0 0.0
    %129 = vmatpush1.msra.mxu0 0.0
    %130 = vmatprep.subr.mxu0 0.0
    %131 = vmatpush1.msra.mxu0 0.0
    %132 = vmatprep.subr.mxu0 0.0
    %133 = vmatpush1.msra.mxu0 0.0
    %134 = vmatprep.subr.mxu0 0.0
    %135 = vmatpush1.msra.mxu0 0.0
    %136 = vmatprep.subr.mxu0 0.0
    %137 = vmatpush1.msra.mxu0 0.0
    %138 = vmatprep.mubr.f32.mxu0 0.0
    %139 = vmatmul.mubr.f32.gmra.mrb[0].mxu0 %v69
    %v140 = vpop.f32.mrb[0].mxu0
    %v141 = vadd.f32 %v65, %v140
    %v142 = vpop.f32.mrb[0].mxu0
    %143 = vmatprep.mubr.f32.mxu0 0.0
    %144 = vmatmul.mubr.f32.gmra.mrb[0].mxu0 %v72
    %v145 = vpop.f32.mrb[0].mxu0
    %v146 = vadd.f32 %v65, %v145
    %v147 = vpop.f32.mrb[0].mxu0
    %148 = vdwg.mxu0
    %v149 = vld [vmem:[#allocation2] sm:$0xff]
    %v150 = vld [vmem:[#allocation2 + $0x8] sm:$0xff]
    %151 = vmax.xlane.f32.xlu0 %v141
    %v152 = vpop.xlane.xlu0 %151
    %153 = vmax.xlane.f32.xlu0 %v146
    %v154 = vpop.xlane.xlu0 %153
    %v155 = vmax.f32 %v149, %v152
    %v156 = vmax.f32 %v150, %v154
    %v157 = vsub.f32 %v149, %v155
    %v158 = vsub.f32 %v150, %v156
    %v159 = vmul.f32 %v157, 1.442695
    %v160 = vpow.pop %v159
    %v161 = vmul.f32 %v158, 1.442695
    %v162 = vpow.pop %v161
    %v163 = vld [vmem:[#allocation3] sm:$0xff]
    %v164 = vld [vmem:[#allocation3 + $0x8] sm:$0xff]
    %v165 = vmul.f32 %v160, %v163
    %v166 = vmul.f32 %v162, %v164
    %168 = vset.pattern.permute.xlu0 0
    %169 = vperm.xlu0 %168, %v155
    %v170 = vpop.permute.xlu0 %169
    %173 = vset.pattern.permute.xlu0 0
    %174 = vperm.xlu0 %173, %v156
    %v175 = vpop.permute.xlu0 %174
    %v177 = vsub.f32 %v141, %v170
    %v178 = vsub.f32 %v146, %v175
    %v179 = vmul.f32 %v177, 1.442695
    %v180 = vpow.pop %v179
    %v181 = vmul.f32 %v178, 1.442695
    %v182 = vpow.pop %v181
    %183 = vadd.xlane.f32.xlu0 %v180
    %v184 = vpop.xlane.xlu0 %183
    %185 = vadd.xlane.f32.xlu0 %v182
    %v186 = vpop.xlane.xlu0 %185
    %v187 = vadd.f32 %v165, %v184
    %v188 = vadd.f32 %v166, %v186
    %vm189 = vcmask 7168
    %190 = vst.msk [vmem:[#allocation3] sm:$0xff] %vm189, %v187
    %191 = vst.msk [vmem:[#allocation3 + $0x8] sm:$0xff] %vm189, %v188
    %192 = vst.msk [vmem:[#allocation2] sm:$0xff] %vm189, %v155
    %193 = vst.msk [vmem:[#allocation2 + $0x8] sm:$0xff] %vm189, %v156
    %194 = vst [vmem:[#allocation9] sm:$0xff] %v141
    %195 = vst [vmem:[#allocation9 + $0x8] sm:$0xff] %v146
    // Predicated region
    $region26: #{tpu_custom_call.1} parent=1 // pred_check
      %p196 = pneg %p45
    $region27: #{tpu_custom_call.1} parent=1 // pred_check_branch
      %198 = sbr.rel (%p196) target = $region29
    $region28: #{tpu_custom_call.1} parent=1 // pred_region
      %v199 = vld [vmem:[#allocation2] sm:$0xff]
      %v200 = vld [vmem:[#allocation2 + $0x8] sm:$0xff]
      %v201 = vld [vmem:[#allocation3] sm:$0xff]
      %v202 = vld [vmem:[#allocation3 + $0x8] sm:$0xff]
      %v203 = vlog2.pop %v201
      %v204 = vmul.f32 %v203, 0.6931472
      %v205 = vlog2.pop %v202
      %v206 = vmul.f32 %v205, 0.6931472
      %v207 = vadd.f32 %v199, %v204
      %v208 = vadd.f32 %v200, %v206
      %209 = vst.msk [vmem:[%s4] sm:$0xff] %vm189, %v207
      %210 = vst.msk [vmem:[%s4 + $0x8] sm:$0xff] %vm189, %v208
    $region29: #{tpu_custom_call.1} parent=1 // pred_fallthru
      _
    // Predicated region
    $region30: #{tpu_custom_call.1} parent=1 // pred_check
      _
    $region31: #{tpu_custom_call.1} parent=1 // pred_check_branch
      %212 = sbr.rel (0) target = $region33
    $region32: #{tpu_custom_call.1} parent=1 // pred_region
      %s214 = ssub.s32 256, 256
      %215 = vsyncadd [#allocation6], %s214
      %s216 = sshll.u32 [#allocation9], 4
      %s217 = int_to_ptr.vmem [resolvable:$true] %s216
      %222 = dma.vmem_to_hbm [thread:$0]  %s217, 256, %s3, [#allocation6], 128, 128, 8
    $region33: #{tpu_custom_call.1} parent=1 // pred_fallthru
      _
    // Predicated region
    $region34: #{tpu_custom_call.1} parent=1 // pred_check
      _
    $region35: #{tpu_custom_call.1} parent=1 // pred_check_branch
      %224 = sbr.rel (0) target = $region37
    $region36: #{tpu_custom_call.1} parent=1 // pred_region
      _
    $region37: #{tpu_custom_call.1} parent=1 // pred_fallthru
      _
    // Predicated region
    $region38: #{tpu_custom_call.1} parent=1 // pred_check
      _
    $region39: #{tpu_custom_call.1} parent=1 // pred_check_branch
      %226 = sbr.rel (0) target = $region41
    $region40: #{tpu_custom_call.1} parent=1 // pred_region
      %227 = dma.done [#allocation6], 256
    $region41: #{tpu_custom_call.1} parent=1 // pred_fallthru
      _
    // Predicated region
    $region42: #{tpu_custom_call.1} parent=1 // pred_check
      _
    $region43: #{tpu_custom_call.1} parent=1 // pred_check_branch
      %229 = sbr.rel (0) target = $region45
    $region44: #{tpu_custom_call.1} parent=1 // pred_region
      _
    $region45: #{tpu_custom_call.1} parent=1 // pred_fallthru
      _
    %230 = vsyncpa [#allocation5], 1
    %231 = vsyncpa [#allocation8], 1
    %232 = vsyncpa [#allocation6], 1

</llo_original>
